<compile_context>
chip_gen: v7x
topology: tpu7x:2x2x1
jax: 0.10.0
libtpu: 0.0.40
codegen_flags: <defaults>
</compile_context>

<pallas_src>
import functools

import jax
import jax.numpy as jnp
from jax import lax
from jax.experimental import pallas as pl
from jax.experimental.pallas import tpu as pltpu


def _round_up(v, m):
    return (v + m - 1) // m * m


def _featmap_kernel(xf_ref, kmt_ref, knorm_ref, o_ref, zacc_ref, sqacc_ref, *,
                    kh, kw, Wp, Lout):
    """Grid = (batch, C-tiles).  One batch element x one channel tile per step.

    xf_ref    : (1, Ct, Lp_pad) bf16   reflect-padded input, spatially flattened
    kmt_ref   : (taps_pad, Ct)  bf16   template: taps on sublanes, channels on lanes
    knorm_ref : (1,)  SMEM f32         ||kern||_2
    o_ref     : (1, 1, Lout) f32       flattened similarity map (lane-dense)
    zacc_ref  : (taps_pad, Lp_pad) f32 per-tap correlation accumulator
    sqacc_ref : (1, Lp_pad) f32        channel-summed squares accumulator
    """
    c = pl.program_id(1)

    xf = xf_ref[0]                                    # (Ct, Lp_pad) bf16
    kmt = kmt_ref[...]                                # (taps_pad, Ct) bf16

    # C-contraction on the MXU (bf16 operands, f32 accumulation).
    prod = jnp.dot(kmt, xf, preferred_element_type=jnp.float32)

    # Channel-summed squares for the tnorm (VPU square + sublane reduce).
    xf32 = xf.astype(jnp.float32)
    sq = jnp.sum(xf32 * xf32, axis=0, keepdims=True)  # (1, Lp_pad)

    @pl.when(c == 0)
    def _first():
        zacc_ref[...] = prod
        sqacc_ref[...] = sq

    @pl.when(c != 0)
    def _rest():
        zacc_ref[...] += prod
        sqacc_ref[...] += sq

    @pl.when(c == pl.num_programs(1) - 1)
    def _finalize():
        z = zacc_ref[...]                             # (taps_pad, Lp_pad)
        ssq = sqacc_ref[...]                          # (1, Lp_pad)

        # sim: kh*kw static taps, cheap lane-shifted 2-D adds.
        sim = jnp.zeros((1, Lout), jnp.float32)
        for dy in range(kh):
            for dx in range(kw):
                t = dy * kw + dx
                s = dy * Wp + dx
                sim = sim + z[t:t + 1, s:s + Lout]

        # tnorm window sum, separable: kh + kw shifts instead of kh*kw.
        Ltmp = Lout + kw - 1
        tmp = jnp.zeros((1, Ltmp), jnp.float32)
        for dy in range(kh):
            s = dy * Wp
            tmp = tmp + ssq[:, s:s + Ltmp]
        nrm = jnp.zeros((1, Lout), jnp.float32)
        for dx in range(kw):
            nrm = nrm + tmp[:, dx:dx + Lout]

        knorm = knorm_ref[0]
        denom = jnp.sqrt(nrm) * knorm + 1e-8
        res = sim * pl.reciprocal(denom, approx=True)
        o_ref[...] = res[None].astype(o_ref.dtype)


def _working_set_bytes(ct, lp_pad, taps_pad, lout):
    """Per-step VMEM working set (double-buffer factor included once)."""
    in_blk = 2 * ct * lp_pad * 2          # bf16 input block, double-buffered
    kmt_blk = 2 * taps_pad * ct * 2       # bf16 template block, double-buffered
    zacc = taps_pad * lp_pad * 4          # f32 correlation accumulator
    sqacc = 8 * lp_pad * 4                # f32 squares accumulator (sublane-padded)
    out_blk = 2 * lout * 4                # f32 output block, double-buffered
    temps = 2 * ct * lp_pad * 4           # f32 upcast + square intermediates
    return in_blk + kmt_blk + zacc + sqacc + out_blk + temps


def _choose_c_tiling(C, lp_pad, taps_pad, lout, budget, block_c):
    """Return (Ct, C_pad): full C in one step if it fits VMEM, else the largest
    128-multiple tile that fits (floor 128, required by the template's lane dim)."""
    full = _round_up(C, 16)
    if block_c is not None:
        if block_c >= C:
            return full, full
        ct = max(128, _round_up(block_c, 128))
        if ct >= C:
            return full, full
        return ct, _round_up(C, ct)
    if C <= 128 or _working_set_bytes(full, lp_pad, taps_pad, lout) <= budget:
        return full, full
    ct = max(128, (C // 128) * 128)
    while ct > 128 and _working_set_bytes(ct, lp_pad, taps_pad, lout) > budget:
        ct -= 128
    if ct >= C:
        return full, full
    return ct, _round_up(C, ct)


def _vmem_budget_bytes():
    """Usable scoped-VMEM budget derived from the actual part (v5e/v6e: 128 MiB,
    v7x: 64 MiB), with headroom for compiler temporaries."""
    try:
        cap = int(getattr(pltpu.get_tpu_info(), "vmem_capacity_bytes", 64 << 20))
    except Exception:
        cap = 64 << 20
    cap = max(cap, 32 << 20)
    return min(int(cap * 0.85), cap - (8 << 20))


@functools.partial(jax.jit, static_argnames=("block_c",))
def feature_map(x, kern, *, block_c=None):
    """x: (N, C, H, W) f32;  kern: (1, C, kh, kw) f32 (PyTorch OIHW layout)."""
    x = x.astype(jnp.float32)
    kern = kern.astype(jnp.float32)
    N, C, H, W = x.shape

    # --- glue: reproduce FeatureMap.__init__ ------------------------------
    kh0, kw0 = kern.shape[2], kern.shape[3]
    kh = kh0 // 2 * 2 + 1
    kw = kw0 // 2 * 2 + 1
    kern = jnp.pad(kern, ((0, 0), (0, 0), (0, kh - kh0), (0, kw - kw0)),
                   mode="reflect")
    knorm = jnp.sqrt(jnp.sum(kern * kern)).reshape(1)   # traced, jit-safe

    # ReflectionPad2d((kw//2, kw//2, kh//2, kh//2))
    ph, pw = kh // 2, kw // 2
    xpad = jnp.pad(x, ((0, 0), (0, 0), (ph, ph), (pw, pw)), mode="reflect")
    Hp, Wp = H + 2 * ph, W + 2 * pw
    Lp = Hp * Wp
    L = (H - 1) * Wp + W          # flat length covering every valid output pixel
    Lout = _round_up(L, 128)      # lane-dense output slab (unmasked stores)
    # Pad the flattened input so every static tap slice of length Lout stays
    # in bounds:  (kh-1)*Wp + (kw-1) + Lout == Lp + (Lout - L).
    Lp_pad = _round_up(Lp + (Lout - L), 128)

    n_taps = kh * kw
    taps_pad = _round_up(n_taps, 16)                    # bf16 sublane packing

    budget = _vmem_budget_bytes()
    Ct, C_pad = _choose_c_tiling(C, Lp_pad, taps_pad, Lout, budget, block_c)
    num_c = C_pad // Ct

    # Flatten spatial dims (lane-dense), cast to bf16, pad C and lanes.
    xflat = xpad.reshape(N, C, Lp).astype(jnp.bfloat16)
    xflat = jnp.pad(xflat, ((0, 0), (0, C_pad - C), (0, Lp_pad - Lp)))

    # Template as a lane-dense (taps, channels) bf16 matrix, padded for the MXU.
    kmt = kern[0].reshape(C, n_taps).T                  # (taps, C)
    kmt = jnp.pad(kmt, ((0, taps_pad - n_taps), (0, C_pad - C))).astype(jnp.bfloat16)

    # Scoped-VMEM limit: working set (double-buffer counted once) + headroom,
    # capped below the part's physical VMEM.
    work = _working_set_bytes(Ct, Lp_pad, taps_pad, Lout)
    vmem_limit = int(min(max(work + (4 << 20), 16 << 20), budget))

    kernel = functools.partial(_featmap_kernel, kh=kh, kw=kw, Wp=Wp, Lout=Lout)

    out_flat = pl.pallas_call(
        kernel,
        out_shape=jax.ShapeDtypeStruct((N, 1, Lout), jnp.float32),
        grid=(N, num_c),
        in_specs=[
            pl.BlockSpec((1, Ct, Lp_pad), lambda n, c: (n, c, 0)),
            pl.BlockSpec((taps_pad, Ct), lambda n, c: (0, c)),
            pl.BlockSpec(memory_space=pltpu.MemorySpace.SMEM),
        ],
        out_specs=pl.BlockSpec((1, 1, Lout), lambda n, c: (n, 0, 0)),
        scratch_shapes=[pltpu.VMEM((taps_pad, Lp_pad), jnp.float32),
                        pltpu.VMEM((1, Lp_pad), jnp.float32)],
        compiler_params=pltpu.CompilerParams(
            dimension_semantics=("parallel", "arbitrary"),
            vmem_limit_bytes=vmem_limit),
    )(xflat, kmt, knorm)

    # Un-flatten: valid outputs live at flat index y*Wp + x with x < W.
    need = H * Wp
    if Lout < need:
        out_flat = jnp.pad(out_flat, ((0, 0), (0, 0), (0, need - Lout)))
    else:
        out_flat = out_flat[:, :, :need]
    return out_flat.reshape(N, 1, H, Wp)[:, :, :, :W]


def feature_map_ref(x, kern):
    """Pure-JAX reference mirroring the PyTorch forward (f32, HIGHEST)."""
    x = x.astype(jnp.float32)
    kern = kern.astype(jnp.float32)
    kh0, kw0 = kern.shape[2], kern.shape[3]
    rh = kh0 // 2 * 2 + 1
    rw = kw0 // 2 * 2 + 1
    kern = jnp.pad(kern, ((0, 0), (0, 0), (0, rh - kh0), (0, rw - kw0)),
                   mode="reflect")
    ph, pw = rh // 2, rw // 2
    xpad = jnp.pad(x, ((0, 0), (0, 0), (ph, ph), (pw, pw)), mode="reflect")
    dn = ("NCHW", "OIHW", "NCHW")
    sim = lax.conv_general_dilated(xpad, kern, (1, 1), "VALID",
                                   dimension_numbers=dn,
                                   precision=lax.Precision.HIGHEST)
    tn = lax.conv_general_dilated(xpad ** 2, jnp.ones_like(kern), (1, 1),
                                  "VALID", dimension_numbers=dn,
                                  precision=lax.Precision.HIGHEST)
    knorm = jnp.sqrt(jnp.sum(kern ** 2))
    return sim / (jnp.sqrt(tn) * knorm + 1e-8)


if __name__ == "__main__":
    key = jax.random.PRNGKey(0)
    kx, kk = jax.random.split(key)

    # Small but representative: C=256 with a 128-channel tile exercises the
    # multi-step C accumulation; odd 3x3 template -> kern reflect-pad is a no-op.
    N, C, H, W = 2, 256, 16, 16
    KH, KW = 3, 3

    x = jax.random.normal(kx, (N, C, H, W), dtype=jnp.float32)
    kern = jax.random.normal(kk, (1, C, KH, KW), dtype=jnp.float32)

    out = jax.block_until_ready(feature_map(x, kern, block_c=128))
    ref = feature_map_ref(x, kern)

    assert out.shape == (N, 1, H, W), out.shape
    # bf16-shipped inputs + bf16 MXU contraction + approx reciprocal epilogue
    # -> looser tolerance than the f32 HIGHEST-precision reference.
    err = float(jnp.max(jnp.abs(out - ref)))
    assert err < 1e-2, err
    print("KERNEL_OK")
</pallas_src>

<mosaic_0001>
module attributes {stable_mosaic.version = 11 : i64} {
  func.func @_featmap_kernel(%arg0: i32, %arg1: i32, %arg2: memref<1x128x512xbf16, #tpu.memory_space<vmem>>, %arg3: memref<16x128xbf16, #tpu.memory_space<vmem>>, %arg4: memref<1xf32, #tpu.memory_space<smem>>, %arg5: memref<1x1x384xf32, #tpu.memory_space<vmem>>, %arg6: memref<16x512xf32, #tpu.memory_space<vmem>>, %arg7: memref<1x512xf32, #tpu.memory_space<vmem>>) attributes {dimension_semantics = [#tpu.dimension_semantics<parallel>, #tpu.dimension_semantics<arbitrary>], iteration_bounds = array<i64: 2, 2>, scalar_prefetch = 0 : i64, scratch_operands = 2 : i64, tpu.core_type = #tpu.core_type<tc>, window_params = [{transform_indices = @transform_0, window_bounds = array<i64: 1, 128, 512>}, {transform_indices = @transform_1, window_bounds = array<i64: 16, 128>}, {transform_indices = @transform_2, window_bounds = array<i64: 1>}, {transform_indices = @transform_3, window_bounds = array<i64: 1, 1, 384>}]} {
    %c0 = arith.constant 0 : index
    %c0_0 = arith.constant 0 : index
    %c0_1 = arith.constant 0 : index
    %0 = vector.load %arg2[%c0, %c0_0, %c0_1] : memref<1x128x512xbf16, #tpu.memory_space<vmem>>, vector<1x128x512xbf16>
    %1 = vector.shape_cast %0 : vector<1x128x512xbf16> to vector<128x512xbf16>
    %c0_2 = arith.constant 0 : index
    %c0_3 = arith.constant 0 : index
    %2 = vector.load %arg3[%c0_2, %c0_3] : memref<16x128xbf16, #tpu.memory_space<vmem>>, vector<16x128xbf16>
    %cst = arith.constant dense<0.000000e+00> : vector<16x512xf32>
    %3 = tpu.matmul %2, %1, %cst {dimension_numbers = #tpu.dot_dimension_numbers<[1], [0], [0], [1], [0, 0, 1, 1], [], []>} : vector<16x128xbf16>, vector<128x512xbf16>, vector<16x512xf32> -> vector<16x512xf32>
    %4 = arith.extf %1 : vector<128x512xbf16> to vector<128x512xf32>
    %5 = arith.mulf %4, %4 : vector<128x512xf32>
    %cst_4 = arith.constant dense<0.000000e+00> : vector<512xf32>
    %6 = vector.multi_reduction <add>, %5, %cst_4 [0] : vector<128x512xf32> to vector<512xf32>
    %7 = vector.shape_cast %6 : vector<512xf32> to vector<1x512xf32>
    %c0_i32 = arith.constant 0 : i32
    %8 = arith.cmpi eq, %arg1, %c0_i32 : i32
    %9 = arith.extui %8 : i1 to i32
    %c0_i32_5 = arith.constant 0 : i32
    %10 = arith.cmpi ne, %9, %c0_i32_5 : i32
    scf.if %10 {
      %c0_9 = arith.constant 0 : index
      %c0_10 = arith.constant 0 : index
      %17 = vector.load %arg6[%c0_9, %c0_10] : memref<16x512xf32, #tpu.memory_space<vmem>>, vector<16x512xf32>
      tpu.vector_store %arg6[%c0_9, %c0_10], %3 {strides = array<i32>} : memref<16x512xf32, #tpu.memory_space<vmem>>, vector<16x512xf32>,
      %c0_11 = arith.constant 0 : index
      %c0_12 = arith.constant 0 : index
      %18 = vector.load %arg7[%c0_11, %c0_12] : memref<1x512xf32, #tpu.memory_space<vmem>>, vector<1x512xf32>
      tpu.vector_store %arg7[%c0_11, %c0_12], %7 {strides = array<i32>} : memref<1x512xf32, #tpu.memory_space<vmem>>, vector<1x512xf32>,
    } else {
    }
    %c0_i32_6 = arith.constant 0 : i32
    %11 = arith.cmpi ne, %arg1, %c0_i32_6 : i32
    %12 = arith.extui %11 : i1 to i32
    %c0_i32_7 = arith.constant 0 : i32
    %13 = arith.cmpi ne, %12, %c0_i32_7 : i32
    scf.if %13 {
      %c0_9 = arith.constant 0 : index
      %c0_10 = arith.constant 0 : index
      %17 = vector.load %arg6[%c0_9, %c0_10] : memref<16x512xf32, #tpu.memory_space<vmem>>, vector<16x512xf32>
      %18 = arith.addf %17, %3 : vector<16x512xf32>
      %c0_11 = arith.constant 0 : index
      %c0_12 = arith.constant 0 : index
      %19 = vector.load %arg6[%c0_11, %c0_12] : memref<16x512xf32, #tpu.memory_space<vmem>>, vector<16x512xf32>
      tpu.vector_store %arg6[%c0_11, %c0_12], %18 {strides = array<i32>} : memref<16x512xf32, #tpu.memory_space<vmem>>, vector<16x512xf32>,
      %c0_13 = arith.constant 0 : index
      %c0_14 = arith.constant 0 : index
      %20 = vector.load %arg7[%c0_13, %c0_14] : memref<1x512xf32, #tpu.memory_space<vmem>>, vector<1x512xf32>
      %21 = arith.addf %20, %7 : vector<1x512xf32>
      %c0_15 = arith.constant 0 : index
      %c0_16 = arith.constant 0 : index
      %22 = vector.load %arg7[%c0_15, %c0_16] : memref<1x512xf32, #tpu.memory_space<vmem>>, vector<1x512xf32>
      tpu.vector_store %arg7[%c0_15, %c0_16], %21 {strides = array<i32>} : memref<1x512xf32, #tpu.memory_space<vmem>>, vector<1x512xf32>,
    } else {
    }
    %c1_i32 = arith.constant 1 : i32
    %14 = arith.cmpi eq, %arg1, %c1_i32 : i32
    %15 = arith.extui %14 : i1 to i32
    %c0_i32_8 = arith.constant 0 : i32
    %16 = arith.cmpi ne, %15, %c0_i32_8 : i32
    scf.if %16 {
      %c0_9 = arith.constant 0 : index
      %c0_10 = arith.constant 0 : index
      %17 = vector.load %arg6[%c0_9, %c0_10] : memref<16x512xf32, #tpu.memory_space<vmem>>, vector<16x512xf32>
      %c0_11 = arith.constant 0 : index
      %c0_12 = arith.constant 0 : index
      %18 = vector.load %arg7[%c0_11, %c0_12] : memref<1x512xf32, #tpu.memory_space<vmem>>, vector<1x512xf32>
      %cst_13 = arith.constant 0.000000e+00 : f32
      %19 = vector.broadcast %cst_13 : f32 to vector<1x384xf32>
      %20 = vector.extract_strided_slice %17 {offsets = [0, 0], sizes = [1, 384], strides = [1, 1]} : vector<16x512xf32> to vector<1x384xf32>
      %21 = arith.addf %19, %20 : vector<1x384xf32>
      %22 = vector.extract_strided_slice %17 {offsets = [1, 1], sizes = [1, 384], strides = [1, 1]} : vector<16x512xf32> to vector<1x384xf32>
      %23 = arith.addf %21, %22 : vector<1x384xf32>
      %24 = vector.extract_strided_slice %17 {offsets = [2, 2], sizes = [1, 384], strides = [1, 1]} : vector<16x512xf32> to vector<1x384xf32>
      %25 = arith.addf %23, %24 : vector<1x384xf32>
      %26 = vector.extract_strided_slice %17 {offsets = [3, 18], sizes = [1, 384], strides = [1, 1]} : vector<16x512xf32> to vector<1x384xf32>
      %27 = arith.addf %25, %26 : vector<1x384xf32>
      %28 = vector.extract_strided_slice %17 {offsets = [4, 19], sizes = [1, 384], strides = [1, 1]} : vector<16x512xf32> to vector<1x384xf32>
      %29 = arith.addf %27, %28 : vector<1x384xf32>
      %30 = vector.extract_strided_slice %17 {offsets = [5, 20], sizes = [1, 384], strides = [1, 1]} : vector<16x512xf32> to vector<1x384xf32>
      %31 = arith.addf %29, %30 : vector<1x384xf32>
      %32 = vector.extract_strided_slice %17 {offsets = [6, 36], sizes = [1, 384], strides = [1, 1]} : vector<16x512xf32> to vector<1x384xf32>
      %33 = arith.addf %31, %32 : vector<1x384xf32>
      %34 = vector.extract_strided_slice %17 {offsets = [7, 37], sizes = [1, 384], strides = [1, 1]} : vector<16x512xf32> to vector<1x384xf32>
      %35 = arith.addf %33, %34 : vector<1x384xf32>
      %36 = vector.extract_strided_slice %17 {offsets = [8, 38], sizes = [1, 384], strides = [1, 1]} : vector<16x512xf32> to vector<1x384xf32>
      %37 = arith.addf %35, %36 : vector<1x384xf32>
      %cst_14 = arith.constant 0.000000e+00 : f32
      %38 = vector.broadcast %cst_14 : f32 to vector<1x386xf32>
      %39 = vector.extract_strided_slice %18 {offsets = [0, 0], sizes = [1, 386], strides = [1, 1]} : vector<1x512xf32> to vector<1x386xf32>
      %40 = arith.addf %38, %39 : vector<1x386xf32>
      %41 = vector.extract_strided_slice %18 {offsets = [0, 18], sizes = [1, 386], strides = [1, 1]} : vector<1x512xf32> to vector<1x386xf32>
      %42 = arith.addf %40, %41 : vector<1x386xf32>
      %43 = vector.extract_strided_slice %18 {offsets = [0, 36], sizes = [1, 386], strides = [1, 1]} : vector<1x512xf32> to vector<1x386xf32>
      %44 = arith.addf %42, %43 : vector<1x386xf32>
      %cst_15 = arith.constant 0.000000e+00 : f32
      %45 = vector.broadcast %cst_15 : f32 to vector<1x384xf32>
      %46 = vector.extract_strided_slice %44 {offsets = [0, 0], sizes = [1, 384], strides = [1, 1]} : vector<1x386xf32> to vector<1x384xf32>
      %47 = arith.addf %45, %46 : vector<1x384xf32>
      %48 = vector.extract_strided_slice %44 {offsets = [0, 1], sizes = [1, 384], strides = [1, 1]} : vector<1x386xf32> to vector<1x384xf32>
      %49 = arith.addf %47, %48 : vector<1x384xf32>
      %50 = vector.extract_strided_slice %44 {offsets = [0, 2], sizes = [1, 384], strides = [1, 1]} : vector<1x386xf32> to vector<1x384xf32>
      %51 = arith.addf %49, %50 : vector<1x384xf32>
      %c0_16 = arith.constant 0 : index
      %52 = memref.load %arg4[%c0_16] : memref<1xf32, #tpu.memory_space<smem>>
      %53 = math.sqrt %51 : vector<1x384xf32>
      %54 = vector.broadcast %52 : f32 to vector<1x384xf32>
      %55 = arith.mulf %53, %54 : vector<1x384xf32>
      %cst_17 = arith.constant 9.99999993E-9 : f32
      %56 = vector.broadcast %cst_17 : f32 to vector<1x384xf32>
      %57 = arith.addf %55, %56 : vector<1x384xf32>
      %58 = tpu.reciprocal %57 {approx = true} : vector<1x384xf32> -> vector<1x384xf32>
      %59 = arith.mulf %37, %58 : vector<1x384xf32>
      %60 = vector.shape_cast %59 : vector<1x384xf32> to vector<1x1x384xf32>
      %c0_18 = arith.constant 0 : index
      %c0_19 = arith.constant 0 : index
      %c0_20 = arith.constant 0 : index
      %61 = vector.load %arg5[%c0_18, %c0_19, %c0_20] : memref<1x1x384xf32, #tpu.memory_space<vmem>>, vector<1x1x384xf32>
      tpu.vector_store %arg5[%c0_18, %c0_19, %c0_20], %60 {strides = array<i32>} : memref<1x1x384xf32, #tpu.memory_space<vmem>>, vector<1x1x384xf32>,
    } else {
    }
    return
  }
  func.func @transform_0(%arg0: i32, %arg1: i32) -> (i32, i32, i32) {
    %c0_i32 = arith.constant 0 : i32
    %c0_i32_0 = arith.constant 0 : i32
    return %arg0, %arg1, %c0_i32 : i32, i32, i32
  }
  func.func @transform_1(%arg0: i32, %arg1: i32) -> (i32, i32) {
    %c0_i32 = arith.constant 0 : i32
    %c0_i32_0 = arith.constant 0 : i32
    return %c0_i32, %arg1 : i32, i32
  }
  func.func @transform_2(%arg0: i32, %arg1: i32) -> i32 {
    %c0_i32 = arith.constant 0 : i32
    %c0_i32_0 = arith.constant 0 : i32
    return %c0_i32 : i32
  }
  func.func @transform_3(%arg0: i32, %arg1: i32) -> (i32, i32, i32) {
    %c0_i32 = arith.constant 0 : i32
    %c0_i32_0 = arith.constant 0 : i32
    %c0_i32_1 = arith.constant 0 : i32
    return %arg0, %c0_i32, %c0_i32_0 : i32, i32, i32
  }
}

</mosaic_0001>

<llo_original>
// kernel: squeeze.0
$region0: #{squeeze.0}
  %s0 = inlined_call_operand.vmem [shape: bf16[256,3,3], index: 0, kind: input, shape index: {}]
  %s1 = inlined_call_operand.vmem [shape: bf16[256,9], index: 1, kind: output, shape index: {}]
  $region1: #{squeeze.0} parent=0
    #allocation0 [shape = 'u8[16384]{0}', space=vmem, size = 0x4000, scoped, tag = 'scoped mem for output reshape']
    #allocation1 [shape = 'u8[24576]{0}', space=vmem, size = 0x6000, scoped, tag = 'scoped mem for input reshape']
    %s3 = smul.u32 2, 2
    %s4 = sshllo.u32 0, %s3
    %s5 = smul.addr 2, 5
    %s6 = scalar_lea.vmem %s0, %s5
    %s7 = sshrl.u32 %s4, 1
    %s8 = sor.u32 %s4, %s7
    %s9 = sand.u32 %s8, 85
    %s10 = sshrl.u32 %s9, 1
    %s11 = sor.u32 %s9, %s10
    %s12 = sand.u32 51, %s11
    %s13 = sshrl.u32 %s12, 2
    %s14 = sor.u32 %s12, %s13
    %s15 = sand.u32 15, %s14
    %v16 = vld [vmem:[%s6] sm:%s15]
    %v17 = vunpack.c.l.bf16 %v16
    %v18 = vunpack.c.h.bf16 %v16
    %s19 = scalar_lea.vmem [#allocation1], 40
    %20 = vst [vmem:[%s19] sm:%s4] %v17
    %s21 = smul.addr 2, 4
    %s22 = scalar_lea.vmem %s0, %s21
    %s23 = sshrl.u32 %s4, 1
    %s24 = sor.u32 %s4, %s23
    %s25 = sand.u32 %s24, 85
    %s26 = sshrl.u32 %s25, 1
    %s27 = sor.u32 %s25, %s26
    %s28 = sand.u32 51, %s27
    %s29 = sshrl.u32 %s28, 2
    %s30 = sor.u32 %s28, %s29
    %s31 = sand.u32 15, %s30
    %v32 = vld [vmem:[%s22] sm:%s31]
    %v33 = vunpack.c.l.bf16 %v32
    %v34 = vunpack.c.h.bf16 %v32
    %s35 = scalar_lea.vmem [#allocation1], 32
    %36 = vst [vmem:[%s35] sm:%s4] %v33
    %s37 = smul.addr 2, 3
    %s38 = scalar_lea.vmem %s0, %s37
    %s39 = sshrl.u32 %s4, 1
    %s40 = sor.u32 %s4, %s39
    %s41 = sand.u32 %s40, 85
    %s42 = sshrl.u32 %s41, 1
    %s43 = sor.u32 %s41, %s42
    %s44 = sand.u32 51, %s43
    %s45 = sshrl.u32 %s44, 2
    %s46 = sor.u32 %s44, %s45
    %s47 = sand.u32 15, %s46
    %v48 = vld [vmem:[%s38] sm:%s47]
    %v49 = vunpack.c.l.bf16 %v48
    %v50 = vunpack.c.h.bf16 %v48
    %s51 = scalar_lea.vmem [#allocation1], 24
    %52 = vst [vmem:[%s51] sm:%s4] %v49
    %s53 = smul.addr 2, 2
    %s54 = scalar_lea.vmem %s0, %s53
    %s55 = sshrl.u32 %s4, 1
    %s56 = sor.u32 %s4, %s55
    %s57 = sand.u32 %s56, 85
    %s58 = sshrl.u32 %s57, 1
    %s59 = sor.u32 %s57, %s58
    %s60 = sand.u32 51, %s59
    %s61 = sshrl.u32 %s60, 2
    %s62 = sor.u32 %s60, %s61
    %s63 = sand.u32 15, %s62
    %v64 = vld [vmem:[%s54] sm:%s63]
    %v65 = vunpack.c.l.bf16 %v64
    %v66 = vunpack.c.h.bf16 %v64
    %s67 = scalar_lea.vmem [#allocation1], 16
    %68 = vst [vmem:[%s67] sm:%s4] %v65
    %s69 = scalar_lea.vmem %s0, 2
    %s70 = sshrl.u32 %s4, 1
    %s71 = sor.u32 %s4, %s70
    %s72 = sand.u32 %s71, 85
    %s73 = sshrl.u32 %s72, 1
    %s74 = sor.u32 %s72, %s73
    %s75 = sand.u32 51, %s74
    %s76 = sshrl.u32 %s75, 2
    %s77 = sor.u32 %s75, %s76
    %s78 = sand.u32 15, %s77
    %v79 = vld [vmem:[%s69] sm:%s78]
    %v80 = vunpack.c.l.bf16 %v79
    %v81 = vunpack.c.h.bf16 %v79
    %s82 = scalar_lea.vmem [#allocation1], 8
    %83 = vst [vmem:[%s82] sm:%s4] %v80
    %s84 = sshrl.u32 %s4, 1
    %s85 = sor.u32 %s4, %s84
    %s86 = sand.u32 %s85, 85
    %s87 = sshrl.u32 %s86, 1
    %s88 = sor.u32 %s86, %s87
    %s89 = sand.u32 51, %s88
    %s90 = sshrl.u32 %s89, 2
    %s91 = sor.u32 %s89, %s90
    %s92 = sand.u32 15, %s91
    %v93 = vld [vmem:[%s0] sm:%s92]
    %v94 = vunpack.c.l.bf16 %v93
    %v95 = vunpack.c.h.bf16 %v93
    %96 = vst [vmem:[#allocation1] sm:%s4] %v94
    %v97 = vld [vmem:[#allocation1] sm:$0x7]
    %98 = vst [vmem:[#allocation0] sm:$0x7] %v97
    %s99 = scalar_lea.vmem [#allocation1], 8
    %v100 = vld [vmem:[%s99] sm:$0x7]
    %s101 = scalar_lea.vmem [#allocation0], 8
    %102 = vst [vmem:[%s101] sm:$0x7] %v100
    %s103 = scalar_lea.vmem [#allocation1], 16
    %v104 = vld [vmem:[%s103] sm:$0x7]
    %s105 = scalar_lea.vmem [#allocation0], 3
    %106 = vst [vmem:[%s105] sm:$0x7] %v104
    %s107 = scalar_lea.vmem [#allocation1], 24
    %v108 = vld [vmem:[%s107] sm:$0x7]
    %s109 = scalar_lea.vmem [#allocation0], 11
    %110 = vst [vmem:[%s109] sm:$0x7] %v108
    %s111 = scalar_lea.vmem [#allocation1], 32
    %v112 = vld [vmem:[%s111] sm:$0x7]
    %s113 = scalar_lea.vmem [#allocation0], 6
    %114 = vst [vmem:[%s113] sm:$0x3] %v112
    %s115 = scalar_lea.vmem [#allocation0], 14
    %116 = vst [vmem:[%s115] sm:$0x4] %v112
    %s117 = scalar_lea.vmem [#allocation1], 40
    %v118 = vld [vmem:[%s117] sm:$0x7]
    %s119 = scalar_lea.vmem [#allocation0], 14
    %120 = vst [vmem:[%s119] sm:$0x3] %v118
    %s121 = scalar_lea.vmem [#allocation0], 22
    %122 = vst [vmem:[%s121] sm:$0x4] %v118
    %s124 = smul.u32 4, 2
    %s125 = sshllo.u32 0, %s124
    %s126 = sshrl.u32 %s124, 1
    %v127 = vld [vmem:[#allocation0] sm:%s125]
    %v128 = vpack.c.bf16 0.0, %v127
    %s129 = sshllo.u32 0, %s126
    %130 = vst [vmem:[%s1] sm:%s129] %v128
    %s131 = scalar_lea.vmem [#allocation0], 8
    %v132 = vld [vmem:[%s131] sm:%s125]
    %v133 = vpack.c.bf16 0.0, %v132
    %s134 = sshllo.u32 0, %s126
    %s135 = scalar_lea.vmem %s1, 4
    %136 = vst [vmem:[%s135] sm:%s134] %v133
    %s137 = scalar_lea.vmem [#allocation0], 16
    %v138 = vld [vmem:[%s137] sm:%s125]
    %v139 = vpack.c.bf16 0.0, %v138
    %s140 = sshllo.u32 0, %s126
    %s141 = smul.addr 4, 2
    %s142 = scalar_lea.vmem %s1, %s141
    %143 = vst [vmem:[%s142] sm:%s140] %v139
    %s144 = scalar_lea.vmem [#allocation0], 24
    %v145 = vld [vmem:[%s144] sm:%s125]
    %v146 = vpack.c.bf16 0.0, %v145
    %s147 = sshllo.u32 0, %s126
    %s148 = smul.addr 4, 3
    %s149 = scalar_lea.vmem %s1, %s148
    %150 = vst [vmem:[%s149] sm:%s147] %v146

// kernel: feature_map.1
$region0: #{feature_map.1}
  #allocation0 [shape = 'u32[]', space=smem, size = 0x4, offset = 0x4, fixed_abs, tag = 'smem constant byte address 0x4 - core index']
  #allocation1 [shape = 'u32[144,128]{1,0:T(1,128)}', space=vmem, size = 0x12000, scoped, tag = 'internal scratch']
  #allocation2 [shape = 'f32[16,512]{1,0:T(8,128)}', space=vmem, size = 0x8000, scoped, tag = 'scratch operand']
  #allocation3 [shape = 'f32[1,512]{1,0:T(1,128)}', space=vmem, size = 0x800, scoped, tag = 'scratch operand']
  #allocation4 [shape = 'f32[1]{0:T(128)S(6)}', space=smem, size = 0x200, scoped, tag = 'scoped memory for feature_map.1']
  %s0 = inlined_call_operand.vmem [shape: bf16[2,256,512], index: 0, kind: input, shape index: {}]
  %s1 = inlined_call_operand.vmem [shape: bf16[16,256], index: 1, kind: input, shape index: {}]
  %s2 = inlined_call_operand.<no memory space> [shape: f32[1], index: 2, kind: input, shape index: {}]
  %s3 = inlined_call_operand.vmem [shape: f32[2,1,384], index: 3, kind: output, shape index: {}]
  %s4 = sld [smem:[#allocation0]]
  $region98: #{feature_map.1} parent=0
    _
  %s6 = ssub.s32 1, %s4
  %s7 = scalar_select 0, %s6, %s4
  %8 = sst [smem:[#allocation4]] %s2
  $region1: #{feature_map.1} parent=0
    #allocation5 [shape = 'u8[8192]{0}', space=vmem, size = 0x2000, scoped, tag = 'input window, operand 1']
    loop: start=0, step=1, limit=6
    $region2: #{feature_map.1} parent=1 // loop_pre_header
      _
    $region3: #{feature_map.1} parent=1 // loop_header
      %s10 = sphi 0, %s14
      %p11 = scmp.ge.s32.totalorder %s10, 6
      %s17 = sphi 0, %s29
      %s18 = sphi 0, %s25
      %s19 = sphi 0, %s17
      %s20 = sphi 0, %s18
      %s21 = sphi 0, %s19
      %s22 = sphi 0, %s20
      %s34 = sphi 0, %s36
      %s37 = sphi 0, %s34
      %s38 = sphi 0, %s37
      %s54 = sphi 0, %s38
      %s60 = sphi 0, %s62
      %s63 = sphi 0, %s60
      %s64 = sphi 0, %s63
      %s80 = sphi 0, %s64
      %s84 = sphi 0, %s84
      %s86 = sphi 0, %s84
      %s87 = sphi 0, %s86
      %s101 = sphi 0, %s87
      %s107 = sphi 0, %s109
      %s110 = sphi 0, %s107
      %s111 = sphi 0, %s110
      %s127 = sphi 0, %s111
    $region4: #{feature_map.1} parent=1 // loop_header_branch
      %13 = sbr.rel (%p11) target = $region8
    $region5: #{feature_map.1} parent=1 // loop_body
      %s15 = ssub.s32 %s10, 1
      %s16 = ssub.s32 %s10, 2
      %s23 = sadd.s32 1, %s18
      %p24 = scmp.ge.s32.totalorder %s23, 2
      %s25 = scalar_select %p24, 0, %s23
      %s26 = sadd.s32 1, %s17
      %s27 = scalar_select %p24, %s26, %s17
      %p28 = scmp.ge.s32.totalorder %s27, 2
      %s29 = scalar_select %p28, 0, %s27
      %s30 = ssub.s32 %s17, %s29
      %s31 = ssub.s32 %s18, %s25
      %s32 = sor.u32 %s30, %s31
      %p33 = scmp.eq.s32.totalorder %s32, 0
      %s35 = sadd.s32 %s34, 1
      %s36 = scalar_select %p33, %s34, %s35
      %p39 = pneg %p33
      %p40 = scmp.eq.s32.totalorder %s10, 3
      %p41 = por %p39, %p40
      %p42 = scmp.ne.s32.totalorder %s34, %s37
      %p43 = scmp.eq.s32.totalorder %s10, 0
      %p44 = por %p42, %p43
      %p45 = scmp.ne.s32.totalorder %s34, %s37
      %p46 = scmp.eq.s32.totalorder %s15, 3
      %p47 = por %p45, %p46
      %p48 = scmp.ne.s32.totalorder %s37, %s38
      %p49 = scmp.eq.s32.totalorder %s15, 0
      %p50 = por %p48, %p49
      %p51 = scmp.ne.s32.totalorder %s37, %s38
      %p52 = scmp.eq.s32.totalorder %s16, 3
      %p53 = por %p51, %p52
      %p55 = scmp.ne.s32.totalorder %s38, %s54
      %p56 = scmp.eq.s32.totalorder %s16, 0
      %p57 = por %p55, %p56
      %s58 = ssub.s32 %s18, %s25
      %p59 = scmp.eq.s32.totalorder %s58, 0
      %s61 = sadd.s32 %s60, 1
      %s62 = scalar_select %p59, %s60, %s61
      %p65 = pneg %p59
      %p66 = scmp.eq.s32.totalorder %s10, 3
      %p67 = por %p65, %p66
      %p68 = scmp.ne.s32.totalorder %s60, %s63
      %p69 = scmp.eq.s32.totalorder %s10, 0
      %p70 = por %p68, %p69
      %p71 = scmp.ne.s32.totalorder %s60, %s63
      %p72 = scmp.eq.s32.totalorder %s15, 3
      %p73 = por %p71, %p72
      %p74 = scmp.ne.s32.totalorder %s63, %s64
      %p75 = scmp.eq.s32.totalorder %s15, 0
      %p76 = por %p74, %p75
      %p77 = scmp.ne.s32.totalorder %s63, %s64
      %p78 = scmp.eq.s32.totalorder %s16, 3
      %p79 = por %p77, %p78
      %p81 = scmp.ne.s32.totalorder %s64, %s80
      %p82 = scmp.eq.s32.totalorder %s16, 0
      %p83 = por %p81, %p82
      %s85 = sadd.s32 %s84, 1
      %p88 = scmp.eq.s32.totalorder %s10, 3
      %p89 = scmp.ne.s32.totalorder %s84, %s86
      %p90 = scmp.eq.s32.totalorder %s10, 0
      %p91 = por %p89, %p90
      %p92 = scmp.ne.s32.totalorder %s84, %s86
      %p93 = scmp.eq.s32.totalorder %s15, 3
      %p94 = por %p92, %p93
      %p95 = scmp.ne.s32.totalorder %s86, %s87
      %p96 = scmp.eq.s32.totalorder %s15, 0
      %p97 = por %p95, %p96
      %p98 = scmp.ne.s32.totalorder %s86, %s87
      %p99 = scmp.eq.s32.totalorder %s16, 3
      %p100 = por %p98, %p99
      %p102 = scmp.ne.s32.totalorder %s87, %s101
      %p103 = scmp.eq.s32.totalorder %s16, 0
      %p104 = por %p102, %p103
      %s105 = ssub.s32 %s17, %s29
      %p106 = scmp.eq.s32.totalorder %s105, 0
      %s108 = sadd.s32 %s107, 1
      %s109 = scalar_select %p106, %s107, %s108
      %p112 = pneg %p106
      %p113 = scmp.eq.s32.totalorder %s10, 3
      %p114 = por %p112, %p113
      %p115 = scmp.ne.s32.totalorder %s107, %s110
      %p116 = scmp.eq.s32.totalorder %s10, 0
      %p117 = por %p115, %p116
      %p118 = scmp.ne.s32.totalorder %s107, %s110
      %p119 = scmp.eq.s32.totalorder %s15, 3
      %p120 = por %p118, %p119
      %p121 = scmp.ne.s32.totalorder %s110, %s111
      %p122 = scmp.eq.s32.totalorder %s15, 0
      %p123 = por %p121, %p122
      %p124 = scmp.ne.s32.totalorder %s110, %s111
      %p125 = scmp.eq.s32.totalorder %s16, 3
      %p126 = por %p124, %p125
      %p128 = scmp.ne.s32.totalorder %s111, %s127
      %p129 = scmp.eq.s32.totalorder %s16, 0
      %p130 = por %p128, %p129
      %p131 = scmp.le.s32.totalorder 1, %s10
      %p132 = scmp.lt.s32.totalorder %s10, 5
      %p133 = pnand %p131, %p132
      %p134 = pneg %p133
      // Predicated region
      $region9: #{feature_map.1} parent=5 // pred_check
        _
      $region10: #{feature_map.1} parent=5 // pred_check_branch
        %136 = sbr.rel (%p133) target = $region12
      $region11: #{feature_map.1} parent=5 // pred_region
        %s137 = ssub.s32 %s10, 1
        // Predicated region
        $region13: #{feature_map.1} parent=11 // pred_check
          %p138 = pneg %p97
        $region14: #{feature_map.1} parent=11 // pred_check_branch
          %140 = sbr.rel (%p138) target = $region16
        $region15: #{feature_map.1} parent=11 // pred_region
          _
        $region16: #{feature_map.1} parent=11 // pred_fallthru
          _
      $region12: #{feature_map.1} parent=5 // pred_fallthru
        _
      %p141 = scmp.lt.s32.totalorder %s10, 4
      // Predicated region
      $region17: #{feature_map.1} parent=5 // pred_check
        %p142 = pneg %p141
      $region18: #{feature_map.1} parent=5 // pred_check_branch
        %144 = sbr.rel (%p142) target = $region20
      $region19: #{feature_map.1} parent=5 // pred_region
        // Predicated region
        $region21: #{feature_map.1} parent=19 // pred_check
          %p145 = pneg %p44
        $region22: #{feature_map.1} parent=19 // pred_check_branch
          %147 = sbr.rel (%p145) target = $region24
        $region23: #{feature_map.1} parent=19 // pred_region
          %s148 = smul.u32 16, %s18
          %p149 = scmp.lt.s32.totalorder %s17, 1
          %s150 = scalar_select %p149, %s17, 1
          %p151 = scmp.lt.s32.totalorder %s148, 31
          %s152 = scalar_select %p151, %s148, 31
          %s153 = smul.addr %s152, 4
          %s154 = smul.addr %s150, 128
          %s155 = sadd.s32 %s153, %s154
          %s156 = smul.addr %s155, 4
          %s157 = scalar_lea.vmem %s0, %s156
          %s158 = smul.u32 16, %s18
        $region24: #{feature_map.1} parent=19 // pred_fallthru
          _
        // Predicated region
        $region25: #{feature_map.1} parent=19 // pred_check
          %p159 = pneg %p70
        $region26: #{feature_map.1} parent=19 // pred_check_branch
          %161 = sbr.rel (%p159) target = $region28
        $region27: #{feature_map.1} parent=19 // pred_region
          %s162 = sand.u32 %s60, 1
          %s163 = sand.u32 %s60, 1
          %s164 = smul.addr %s163, 8
          %s165 = scalar_lea.vmem [#allocation5], %s164
          %s166 = smul.addr %s18, 4
          %s167 = scalar_lea.vmem %s1, %s166
          // Predicated region
          $region29: #{feature_map.1} parent=27 // pred_check
            _
          $region30: #{feature_map.1} parent=27 // pred_check_branch
            %169 = sbr.rel (0) target = $region32
          $region31: #{feature_map.1} parent=27 // pred_region
            // Predicated region
            $region33: #{feature_map.1} parent=31 // pred_check
              _
            $region34: #{feature_map.1} parent=31 // pred_check_branch
              %171 = sbr.rel target = $region36
            $region35: #{feature_map.1} parent=31 // pred_region
              // Predicated region
              $region48: #{feature_map.1} parent=35 // pred_check
                _
              $region49: #{feature_map.1} parent=35 // pred_check_branch
                %188 = sbr.rel (0) target = $region51
              $region50: #{feature_map.1} parent=35 // pred_region
                loop: start=0, step=1, limit=1
                $region52: #{feature_map.1} parent=50 // loop_pre_header
                  _
                $region53: #{feature_map.1} parent=50 // loop_header
                  %s190 = sphi 0, %s194
                  %p191 = scmp.ge.s32.totalorder %s190, 1
                  %s195 = sphi %s167, %s167
                  %s196 = sphi %s165, %s165
                $region54: #{feature_map.1} parent=50 // loop_header_branch
                  %193 = sbr.rel (%p191) target = $region58
                $region55: #{feature_map.1} parent=50 // loop_body
                  _
                $region56: #{feature_map.1} parent=50 // loop_footer
                  %s194 = sadd.s32 1, %s190
                $region57: #{feature_map.1} parent=50 // loop_footer_branch
                  %189 = sbr.rel target = $region53
                $region58: #{feature_map.1} parent=50 // loop_exit
                  _
                loop: start=0, step=1, limit=1
                $region59: #{feature_map.1} parent=50 // loop_pre_header
                  _
                $region60: #{feature_map.1} parent=50 // loop_header
                  %s199 = sphi 0, %s203
                  %p200 = scmp.ge.s32.totalorder %s199, 1
                  %s204 = sphi %s167, %s167
                  %s205 = sphi %s165, %s165
                $region61: #{feature_map.1} parent=50 // loop_header_branch
                  %202 = sbr.rel (%p200) target = $region65
                $region62: #{feature_map.1} parent=50 // loop_body
                  %v206 = vld [vmem:[%s204] sm:$0xf]
                  %207 = vst [vmem:[%s205] sm:$0xf] %v206
                  %v208 = vld [vmem:[%s204 + $0x8] sm:$0xf]
                  %209 = vst [vmem:[%s205 + $0x4] sm:$0xf] %v208
                $region63: #{feature_map.1} parent=50 // loop_footer
                  %s203 = sadd.s32 1, %s199
                $region64: #{feature_map.1} parent=50 // loop_footer_branch
                  %198 = sbr.rel target = $region60
                $region65: #{feature_map.1} parent=50 // loop_exit
                  _
              $region51: #{feature_map.1} parent=35 // pred_fallthru
                _
            $region36: #{feature_map.1} parent=31 // pred_fallthru
              _
            // Predicated region
            $region37: #{feature_map.1} parent=31 // pred_check
              _
            $region38: #{feature_map.1} parent=31 // pred_check_branch
              %173 = sbr.rel (0) target = $region40
            $region39: #{feature_map.1} parent=31 // pred_region
              loop: start=0, step=1, limit=1
              $region41: #{feature_map.1} parent=39 // loop_pre_header
                _
              $region42: #{feature_map.1} parent=39 // loop_header
                %s176 = sphi 0, %s180
                %p177 = scmp.ge.s32.totalorder %s176, 1
                %s181 = sphi %s167, %s167
                %s182 = sphi %s165, %s165
              $region43: #{feature_map.1} parent=39 // loop_header_branch
                %179 = sbr.rel (%p177) target = $region47
              $region44: #{feature_map.1} parent=39 // loop_body
                %v183 = vld [vmem:[%s181] sm:$0xf]
                %184 = vst [vmem:[%s182] sm:$0xf] %v183
                %v185 = vld [vmem:[%s181 + $0x8] sm:$0xf]
                %186 = vst [vmem:[%s182 + $0x4] sm:$0xf] %v185
              $region45: #{feature_map.1} parent=39 // loop_footer
                %s180 = sadd.s32 1, %s176
              $region46: #{feature_map.1} parent=39 // loop_footer_branch
                %175 = sbr.rel target = $region42
              $region47: #{feature_map.1} parent=39 // loop_exit
                _
            $region40: #{feature_map.1} parent=31 // pred_fallthru
              _
          $region32: #{feature_map.1} parent=27 // pred_fallthru
            _
          %210 = vnop
        $region28: #{feature_map.1} parent=19 // pred_fallthru
          _
      $region20: #{feature_map.1} parent=5 // pred_fallthru
        _
      %p211 = scmp.le.s32.totalorder 1, %s10
      %p212 = scmp.lt.s32.totalorder %s10, 5
      %p213 = pnand %p211, %p212
      %p214 = pneg %p213
      // Predicated region
      $region66: #{feature_map.1} parent=5 // pred_check
        _
      $region67: #{feature_map.1} parent=5 // pred_check_branch
        %216 = sbr.rel (%p213) target = $region69
      $region68: #{feature_map.1} parent=5 // pred_region
        %s217 = ssub.s32 %s10, 1
        %s218 = sand.u32 %s63, 1
        %s219 = sand.u32 %s63, 1
        %s220 = smul.addr %s219, 8
        %s221 = scalar_lea.vmem [#allocation5], %s220
        // Predicated region
        $region70: #{feature_map.1} parent=68 // pred_check
          %p222 = pneg %p76
        $region71: #{feature_map.1} parent=68 // pred_check_branch
          %224 = sbr.rel (%p222) target = $region73
        $region72: #{feature_map.1} parent=68 // pred_region
          _
        $region73: #{feature_map.1} parent=68 // pred_fallthru
          _
        %s225 = smul.u32 16, %s20
        %p226 = scmp.lt.s32.totalorder %s19, 1
        %s227 = scalar_select %p226, %s19, 1
        %p228 = scmp.lt.s32.totalorder %s225, 31
        %s229 = scalar_select %p228, %s225, 31
        %s230 = smul.addr %s229, 4
        %s231 = smul.addr %s227, 128
        %s232 = sadd.s32 %s230, %s231
        %s233 = smul.addr %s232, 4
        %s234 = scalar_lea.vmem %s0, %s233
        %p235 = pneg %p50
        %p236 = pneg %p47
        %s237 = sand.u32 %s63, 1
        %s238 = sand.u32 %s63, 1
        %s239 = smul.addr %s238, 8
        %s240 = scalar_lea.vmem [#allocation5], %s239
        %p241 = pneg %p76
        %p242 = pneg %p73
        %p243 = pneg %p97
        %p244 = pneg %p94
        %p245 = pneg %p123
        %p246 = pneg %p120
        %p247 = scmp.lt.s32.totalorder %s19, 1
        %s248 = scalar_select %p247, %s19, 1
        %s249 = smul.addr %s248, 3
        %s250 = scalar_lea.vmem %s3, %s249
        %s251 = smul.u32 16, %s20
        %p252 = scmp.lt.s32.totalorder %s19, 1
        %s253 = scalar_select %p252, %s19, 1
        %p254 = scmp.lt.s32.totalorder %s251, 31
        %s255 = scalar_select %p254, %s251, 31
        %s256 = smul.addr %s255, 4
        %s257 = smul.addr %s253, 128
        %s258 = sadd.s32 %s256, %s257
        %s259 = smul.addr %s258, 4
        %s260 = scalar_lea.vmem %s0, %s259
        %s261 = smul.u32 16, %s20
        %p262 = scmp.lt.s32.totalorder %s19, 1
        %s263 = scalar_select %p262, %s19, 1
        %s264 = smul.addr %s263, 3
        %s265 = scalar_lea.vmem %s3, %s264
        %v267 = vld [vmem:[%s260] sm:$0xff]
        %v268 = vld [vmem:[%s260 + $0x8] sm:$0xff]
        %v269 = vld [vmem:[%s260 + $0x10] sm:$0xff]
        %v270 = vld [vmem:[%s260 + $0x18] sm:$0xff]
        %v271 = vld [vmem:[%s260 + $0x20] sm:$0xff]
        %v272 = vld [vmem:[%s260 + $0x28] sm:$0xff]
        %v273 = vld [vmem:[%s260 + $0x30] sm:$0xff]
        %v274 = vld [vmem:[%s260 + $0x38] sm:$0xff]
        %v275 = vld [vmem:[%s260 + $0x40] sm:$0xff]
        %v276 = vld [vmem:[%s260 + $0x48] sm:$0xff]
        %v277 = vld [vmem:[%s260 + $0x50] sm:$0xff]
        %v278 = vld [vmem:[%s260 + $0x58] sm:$0xff]
        %v279 = vld [vmem:[%s260 + $0x60] sm:$0xff]
        %v280 = vld [vmem:[%s260 + $0x68] sm:$0xff]
        %v281 = vld [vmem:[%s260 + $0x70] sm:$0xff]
        %v282 = vld [vmem:[%s260 + $0x78] sm:$0xff]
        %v283 = vld [vmem:[%s260 + $0x80] sm:$0xff]
        %v284 = vld [vmem:[%s260 + $0x88] sm:$0xff]
        %v285 = vld [vmem:[%s260 + $0x90] sm:$0xff]
        %v286 = vld [vmem:[%s260 + $0x98] sm:$0xff]
        %v287 = vld [vmem:[%s260 + $0xa0] sm:$0xff]
        %v288 = vld [vmem:[%s260 + $0xa8] sm:$0xff]
        %v289 = vld [vmem:[%s260 + $0xb0] sm:$0xff]
        %v290 = vld [vmem:[%s260 + $0xb8] sm:$0xff]
        %v291 = vld [vmem:[%s260 + $0xc0] sm:$0xff]
        %v292 = vld [vmem:[%s260 + $0xc8] sm:$0xff]
        %v293 = vld [vmem:[%s260 + $0xd0] sm:$0xff]
        %v294 = vld [vmem:[%s260 + $0xd8] sm:$0xff]
        %v295 = vld [vmem:[%s260 + $0xe0] sm:$0xff]
        %v296 = vld [vmem:[%s260 + $0xe8] sm:$0xff]
        %v297 = vld [vmem:[%s260 + $0xf0] sm:$0xff]
        %v298 = vld [vmem:[%s260 + $0xf8] sm:$0xff]
        %v299 = vld [vmem:[%s221] sm:$0xf]
        %v300 = vld [vmem:[%s221 + $0x4] sm:$0xf]
        %v303 = vunpack.c.l.b16 %v299
        %v304 = vunpack.c.l.b16 %v300
        %v305 = vpack.c.b16 %v304, %v303
        %v339 = vunpack.c.l.b16 %v267
        %v340 = vunpack.c.h.b16 %v267
        %v341 = vunpack.c.l.b16 %v268
        %v342 = vunpack.c.h.b16 %v268
        %v343 = vunpack.c.l.b16 %v269
        %v344 = vunpack.c.h.b16 %v269
        %v345 = vunpack.c.l.b16 %v270
        %v346 = vunpack.c.h.b16 %v270
        %v347 = vunpack.c.l.b16 %v271
        %v348 = vunpack.c.h.b16 %v271
        %v349 = vunpack.c.l.b16 %v272
        %v350 = vunpack.c.h.b16 %v272
        %v351 = vunpack.c.l.b16 %v273
        %v352 = vunpack.c.h.b16 %v273
        %v353 = vunpack.c.l.b16 %v274
        %v354 = vunpack.c.h.b16 %v274
        %v355 = vunpack.c.l.b16 %v275
        %v356 = vunpack.c.h.b16 %v275
        %v357 = vunpack.c.l.b16 %v276
        %v358 = vunpack.c.h.b16 %v276
        %v359 = vunpack.c.l.b16 %v277
        %v360 = vunpack.c.h.b16 %v277
        %v361 = vunpack.c.l.b16 %v278
        %v362 = vunpack.c.h.b16 %v278
        %v363 = vunpack.c.l.b16 %v279
        %v364 = vunpack.c.h.b16 %v279
        %v365 = vunpack.c.l.b16 %v280
        %v366 = vunpack.c.h.b16 %v280
        %v367 = vunpack.c.l.b16 %v281
        %v368 = vunpack.c.h.b16 %v281
        %v369 = vunpack.c.l.b16 %v282
        %v370 = vunpack.c.h.b16 %v282
        %v371 = vunpack.c.l.b16 %v283
        %v372 = vunpack.c.h.b16 %v283
        %v373 = vunpack.c.l.b16 %v284
        %v374 = vunpack.c.h.b16 %v284
        %v375 = vunpack.c.l.b16 %v285
        %v376 = vunpack.c.h.b16 %v285
        %v377 = vunpack.c.l.b16 %v286
        %v378 = vunpack.c.h.b16 %v286
        %v379 = vunpack.c.l.b16 %v287
        %v380 = vunpack.c.h.b16 %v287
        %v381 = vunpack.c.l.b16 %v288
        %v382 = vunpack.c.h.b16 %v288
        %v383 = vunpack.c.l.b16 %v289
        %v384 = vunpack.c.h.b16 %v289
        %v385 = vunpack.c.l.b16 %v290
        %v386 = vunpack.c.h.b16 %v290
        %v387 = vunpack.c.l.b16 %v291
        %v388 = vunpack.c.h.b16 %v291
        %v389 = vunpack.c.l.b16 %v292
        %v390 = vunpack.c.h.b16 %v292
        %v391 = vunpack.c.l.b16 %v293
        %v392 = vunpack.c.h.b16 %v293
        %v393 = vunpack.c.l.b16 %v294
        %v394 = vunpack.c.h.b16 %v294
        %v395 = vunpack.c.l.b16 %v295
        %v396 = vunpack.c.h.b16 %v295
        %v397 = vunpack.c.l.b16 %v296
        %v398 = vunpack.c.h.b16 %v296
        %v399 = vunpack.c.l.b16 %v297
        %v400 = vunpack.c.h.b16 %v297
        %v401 = vunpack.c.l.b16 %v298
        %v402 = vunpack.c.h.b16 %v298
        %v403 = vpack.c.b16 %v343, %v339
        %v404 = vpack.c.b16 %v344, %v340
        %v405 = vpack.c.b16 %v345, %v341
        %v406 = vpack.c.b16 %v346, %v342
        %v407 = vpack.c.b16 %v351, %v347
        %v408 = vpack.c.b16 %v352, %v348
        %v409 = vpack.c.b16 %v353, %v349
        %v410 = vpack.c.b16 %v354, %v350
        %v411 = vpack.c.b16 %v359, %v355
        %v412 = vpack.c.b16 %v360, %v356
        %v413 = vpack.c.b16 %v361, %v357
        %v414 = vpack.c.b16 %v362, %v358
        %v415 = vpack.c.b16 %v367, %v363
        %v416 = vpack.c.b16 %v368, %v364
        %v417 = vpack.c.b16 %v369, %v365
        %v418 = vpack.c.b16 %v370, %v366
        %v419 = vpack.c.b16 %v375, %v371
        %v420 = vpack.c.b16 %v376, %v372
        %v421 = vpack.c.b16 %v377, %v373
        %v422 = vpack.c.b16 %v378, %v374
        %v423 = vpack.c.b16 %v383, %v379
        %v424 = vpack.c.b16 %v384, %v380
        %v425 = vpack.c.b16 %v385, %v381
        %v426 = vpack.c.b16 %v386, %v382
        %v427 = vpack.c.b16 %v391, %v387
        %v428 = vpack.c.b16 %v392, %v388
        %v429 = vpack.c.b16 %v393, %v389
        %v430 = vpack.c.b16 %v394, %v390
        %v431 = vpack.c.b16 %v399, %v395
        %v432 = vpack.c.b16 %v400, %v396
        %v433 = vpack.c.b16 %v401, %v397
        %v434 = vpack.c.b16 %v402, %v398
        %467 = vmatprep.subr.bf16.mxu0 %v404
        %468 = vmatpush1.bf16.msra.mxu0 %v403
        %469 = vmatprep.subr.bf16.mxu0 %v408
        %470 = vmatpush1.bf16.msra.mxu0 %v407
        %471 = vmatprep.subr.bf16.mxu0 %v412
        %472 = vmatpush1.bf16.msra.mxu0 %v411
        %473 = vmatprep.subr.bf16.mxu0 %v416
        %474 = vmatpush1.bf16.msra.mxu0 %v415
        %475 = vmatprep.subr.bf16.mxu0 %v420
        %476 = vmatpush1.bf16.msra.mxu0 %v419
        %477 = vmatprep.subr.bf16.mxu0 %v424
        %478 = vmatpush1.bf16.msra.mxu0 %v423
        %479 = vmatprep.subr.bf16.mxu0 %v428
        %480 = vmatpush1.bf16.msra.mxu0 %v427
        %481 = vmatprep.subr.bf16.mxu0 %v432
        %482 = vmatpush1.bf16.msra.mxu0 %v431
        %483 = vmatprep.subr.bf16.mxu0 0
        %484 = vmatpush1.bf16.msra.mxu0 0
        %485 = vmatprep.subr.bf16.mxu0 0
        %486 = vmatpush1.bf16.msra.mxu0 0
        %487 = vmatprep.subr.bf16.mxu0 0
        %488 = vmatpush1.bf16.msra.mxu0 0
        %489 = vmatprep.subr.bf16.mxu0 0
        %490 = vmatpush1.bf16.msra.mxu0 0
        %491 = vmatprep.subr.bf16.mxu0 0
        %492 = vmatpush1.bf16.msra.mxu0 0
        %493 = vmatprep.subr.bf16.mxu0 0
        %494 = vmatpush1.bf16.msra.mxu0 0
        %495 = vmatprep.subr.bf16.mxu0 0
        %496 = vmatpush1.bf16.msra.mxu0 0
        %497 = vmatprep.subr.bf16.mxu0 0
        %498 = vmatpush1.bf16.msra.mxu0 0
        %499 = vmatprep.mubr.bf16.mxu0 0
        %500 = vmatmul.mubr.bf16.gmra.mrb[0].mxu0 %v305
        %v501 = vpop.f32.mrb[0].mxu0
        %v502 = vadd.f32 0.0, %v501
        %v503 = vpop.f32.mrb[0].mxu0
        %v504 = vadd.f32 0.0, %v503
        %v505 = vpop.f32.mrb[0].mxu0
        %v506 = vadd.f32 0.0, %v505
        %v507 = vpop.f32.mrb[0].mxu0
        %v508 = vadd.f32 0.0, %v507
        %509 = vdwg.mxu0
        %510 = vmatprep.subr.bf16.mxu0 %v406
        %511 = vmatpush1.bf16.msra.mxu0 %v405
        %512 = vmatprep.subr.bf16.mxu0 %v410
        %513 = vmatpush1.bf16.msra.mxu0 %v409
        %514 = vmatprep.subr.bf16.mxu0 %v414
        %515 = vmatpush1.bf16.msra.mxu0 %v413
        %516 = vmatprep.subr.bf16.mxu0 %v418
        %517 = vmatpush1.bf16.msra.mxu0 %v417
        %518 = vmatprep.subr.bf16.mxu0 %v422
        %519 = vmatpush1.bf16.msra.mxu0 %v421
        %520 = vmatprep.subr.bf16.mxu0 %v426
        %521 = vmatpush1.bf16.msra.mxu0 %v425
        %522 = vmatprep.subr.bf16.mxu0 %v430
        %523 = vmatpush1.bf16.msra.mxu0 %v429
        %524 = vmatprep.subr.bf16.mxu0 %v434
        %525 = vmatpush1.bf16.msra.mxu0 %v433
        %526 = vmatprep.subr.bf16.mxu0 0
        %527 = vmatpush1.bf16.msra.mxu0 0
        %528 = vmatprep.subr.bf16.mxu0 0
        %529 = vmatpush1.bf16.msra.mxu0 0
        %530 = vmatprep.subr.bf16.mxu0 0
        %531 = vmatpush1.bf16.msra.mxu0 0
        %532 = vmatprep.subr.bf16.mxu0 0
        %533 = vmatpush1.bf16.msra.mxu0 0
        %534 = vmatprep.subr.bf16.mxu0 0
        %535 = vmatpush1.bf16.msra.mxu0 0
        %536 = vmatprep.subr.bf16.mxu0 0
        %537 = vmatpush1.bf16.msra.mxu0 0
        %538 = vmatprep.subr.bf16.mxu0 0
        %539 = vmatpush1.bf16.msra.mxu0 0
        %540 = vmatprep.subr.bf16.mxu0 0
        %541 = vmatpush1.bf16.msra.mxu0 0
        %542 = vmatprep.mubr.bf16.mxu0 0
        %543 = vmatmul.mubr.bf16.gmra.mrb[0].mxu0 %v305
        %v544 = vpop.f32.mrb[0].mxu0
        %v545 = vadd.f32 0.0, %v544
        %v546 = vpop.f32.mrb[0].mxu0
        %v547 = vadd.f32 0.0, %v546
        %v548 = vpop.f32.mrb[0].mxu0
        %v549 = vadd.f32 0.0, %v548
        %v550 = vpop.f32.mrb[0].mxu0
        %v551 = vadd.f32 0.0, %v550
        %552 = vdwg.mxu0
        %v553 = vunpack.c.l.bf16 %v267
        %v554 = vunpack.c.h.bf16 %v267
        %v555 = vunpack.c.l.bf16 %v268
        %v556 = vunpack.c.h.bf16 %v268
        %v557 = vunpack.c.l.bf16 %v269
        %v558 = vunpack.c.h.bf16 %v269
        %v559 = vunpack.c.l.bf16 %v270
        %v560 = vunpack.c.h.bf16 %v270
        %v561 = vunpack.c.l.bf16 %v271
        %v562 = vunpack.c.h.bf16 %v271
        %v563 = vunpack.c.l.bf16 %v272
        %v564 = vunpack.c.h.bf16 %v272
        %v565 = vunpack.c.l.bf16 %v273
        %v566 = vunpack.c.h.bf16 %v273
        %v567 = vunpack.c.l.bf16 %v274
        %v568 = vunpack.c.h.bf16 %v274
        %v569 = vunpack.c.l.bf16 %v275
        %v570 = vunpack.c.h.bf16 %v275
        %v571 = vunpack.c.l.bf16 %v276
        %v572 = vunpack.c.h.bf16 %v276
        %v573 = vunpack.c.l.bf16 %v277
        %v574 = vunpack.c.h.bf16 %v277
        %v575 = vunpack.c.l.bf16 %v278
        %v576 = vunpack.c.h.bf16 %v278
        %v577 = vunpack.c.l.bf16 %v279
        %v578 = vunpack.c.h.bf16 %v279
        %v579 = vunpack.c.l.bf16 %v280
        %v580 = vunpack.c.h.bf16 %v280
        %v581 = vunpack.c.l.bf16 %v281
        %v582 = vunpack.c.h.bf16 %v281
        %v583 = vunpack.c.l.bf16 %v282
        %v584 = vunpack.c.h.bf16 %v282
        %v585 = vunpack.c.l.bf16 %v283
        %v586 = vunpack.c.h.bf16 %v283
        %v587 = vunpack.c.l.bf16 %v284
        %v588 = vunpack.c.h.bf16 %v284
        %v589 = vunpack.c.l.bf16 %v285
        %v590 = vunpack.c.h.bf16 %v285
        %v591 = vunpack.c.l.bf16 %v286
        %v592 = vunpack.c.h.bf16 %v286
        %v593 = vunpack.c.l.bf16 %v287
        %v594 = vunpack.c.h.bf16 %v287
        %v595 = vunpack.c.l.bf16 %v288
        %v596 = vunpack.c.h.bf16 %v288
        %v597 = vunpack.c.l.bf16 %v289
        %v598 = vunpack.c.h.bf16 %v289
        %v599 = vunpack.c.l.bf16 %v290
        %v600 = vunpack.c.h.bf16 %v290
        %v601 = vunpack.c.l.bf16 %v291
        %v602 = vunpack.c.h.bf16 %v291
        %v603 = vunpack.c.l.bf16 %v292
        %v604 = vunpack.c.h.bf16 %v292
        %v605 = vunpack.c.l.bf16 %v293
        %v606 = vunpack.c.h.bf16 %v293
        %v607 = vunpack.c.l.bf16 %v294
        %v608 = vunpack.c.h.bf16 %v294
        %v609 = vunpack.c.l.bf16 %v295
        %v610 = vunpack.c.h.bf16 %v295
        %v611 = vunpack.c.l.bf16 %v296
        %v612 = vunpack.c.h.bf16 %v296
        %v613 = vunpack.c.l.bf16 %v297
        %v614 = vunpack.c.h.bf16 %v297
        %v615 = vunpack.c.l.bf16 %v298
        %v616 = vunpack.c.h.bf16 %v298
        %v617 = vmul.f32 %v553, %v553
        %v618 = vmul.f32 %v554, %v554
        %v619 = vmul.f32 %v555, %v555
        %v620 = vmul.f32 %v556, %v556
        %v621 = vmul.f32 %v557, %v557
        %v622 = vmul.f32 %v558, %v558
        %v623 = vmul.f32 %v559, %v559
        %v624 = vmul.f32 %v560, %v560
        %v625 = vmul.f32 %v561, %v561
        %v626 = vmul.f32 %v562, %v562
        %v627 = vmul.f32 %v563, %v563
        %v628 = vmul.f32 %v564, %v564
        %v629 = vmul.f32 %v565, %v565
        %v630 = vmul.f32 %v566, %v566
        %v631 = vmul.f32 %v567, %v567
        %v632 = vmul.f32 %v568, %v568
        %v633 = vmul.f32 %v569, %v569
        %v634 = vmul.f32 %v570, %v570
        %v635 = vmul.f32 %v571, %v571
        %v636 = vmul.f32 %v572, %v572
        %v637 = vmul.f32 %v573, %v573
        %v638 = vmul.f32 %v574, %v574
        %v639 = vmul.f32 %v575, %v575
        %v640 = vmul.f32 %v576, %v576
        %v641 = vmul.f32 %v577, %v577
        %v642 = vmul.f32 %v578, %v578
        %v643 = vmul.f32 %v579, %v579
        %v644 = vmul.f32 %v580, %v580
        %v645 = vmul.f32 %v581, %v581
        %v646 = vmul.f32 %v582, %v582
        %v647 = vmul.f32 %v583, %v583
        %v648 = vmul.f32 %v584, %v584
        %v649 = vmul.f32 %v585, %v585
        %v650 = vmul.f32 %v586, %v586
        %v651 = vmul.f32 %v587, %v587
        %v652 = vmul.f32 %v588, %v588
        %v653 = vmul.f32 %v589, %v589
        %v654 = vmul.f32 %v590, %v590
        %v655 = vmul.f32 %v591, %v591
        %v656 = vmul.f32 %v592, %v592
        %v657 = vmul.f32 %v593, %v593
        %v658 = vmul.f32 %v594, %v594
        %v659 = vmul.f32 %v595, %v595
        %v660 = vmul.f32 %v596, %v596
        %v661 = vmul.f32 %v597, %v597
        %v662 = vmul.f32 %v598, %v598
        %v663 = vmul.f32 %v599, %v599
        %v664 = vmul.f32 %v600, %v600
        %v665 = vmul.f32 %v601, %v601
        %v666 = vmul.f32 %v602, %v602
        %v667 = vmul.f32 %v603, %v603
        %v668 = vmul.f32 %v604, %v604
        %v669 = vmul.f32 %v605, %v605
        %v670 = vmul.f32 %v606, %v606
        %v671 = vmul.f32 %v607, %v607
        %v672 = vmul.f32 %v608, %v608
        %v673 = vmul.f32 %v609, %v609
        %v674 = vmul.f32 %v610, %v610
        %v675 = vmul.f32 %v611, %v611
        %v676 = vmul.f32 %v612, %v612
        %v677 = vmul.f32 %v613, %v613
        %v678 = vmul.f32 %v614, %v614
        %v679 = vmul.f32 %v615, %v615
        %v680 = vmul.f32 %v616, %v616
        %v681 = vadd.f32 %v617, %v621
        %v682 = vadd.f32 %v681, %v625
        %v683 = vadd.f32 %v682, %v629
        %v684 = vadd.f32 %v683, %v633
        %v685 = vadd.f32 %v684, %v637
        %v686 = vadd.f32 %v685, %v641
        %v687 = vadd.f32 %v686, %v645
        %v688 = vadd.f32 %v687, %v649
        %v689 = vadd.f32 %v688, %v653
        %v690 = vadd.f32 %v689, %v657
        %v691 = vadd.f32 %v690, %v661
        %v692 = vadd.f32 %v691, %v665
        %v693 = vadd.f32 %v692, %v669
        %v694 = vadd.f32 %v693, %v673
        %v695 = vadd.f32 %v694, %v677
        %v696 = vrot.slane %v695, 4
        %v697 = vadd.f32 %v695, %v696
        %v698 = vrot.slane %v697, 2
        %v699 = vadd.f32 %v697, %v698
        %v700 = vrot.slane %v699, 1
        %v701 = vadd.f32 %v699, %v700
        %v702 = vadd.f32 %v618, %v622
        %v703 = vadd.f32 %v702, %v626
        %v704 = vadd.f32 %v703, %v630
        %v705 = vadd.f32 %v704, %v634
        %v706 = vadd.f32 %v705, %v638
        %v707 = vadd.f32 %v706, %v642
        %v708 = vadd.f32 %v707, %v646
        %v709 = vadd.f32 %v708, %v650
        %v710 = vadd.f32 %v709, %v654
        %v711 = vadd.f32 %v710, %v658
        %v712 = vadd.f32 %v711, %v662
        %v713 = vadd.f32 %v712, %v666
        %v714 = vadd.f32 %v713, %v670
        %v715 = vadd.f32 %v714, %v674
        %v716 = vadd.f32 %v715, %v678
        %v717 = vrot.slane %v716, 4
        %v718 = vadd.f32 %v716, %v717
        %v719 = vrot.slane %v718, 2
        %v720 = vadd.f32 %v718, %v719
        %v721 = vrot.slane %v720, 1
        %v722 = vadd.f32 %v720, %v721
        %v723 = vadd.f32 %v619, %v623
        %v724 = vadd.f32 %v723, %v627
        %v725 = vadd.f32 %v724, %v631
        %v726 = vadd.f32 %v725, %v635
        %v727 = vadd.f32 %v726, %v639
        %v728 = vadd.f32 %v727, %v643
        %v729 = vadd.f32 %v728, %v647
        %v730 = vadd.f32 %v729, %v651
        %v731 = vadd.f32 %v730, %v655
        %v732 = vadd.f32 %v731, %v659
        %v733 = vadd.f32 %v732, %v663
        %v734 = vadd.f32 %v733, %v667
        %v735 = vadd.f32 %v734, %v671
        %v736 = vadd.f32 %v735, %v675
        %v737 = vadd.f32 %v736, %v679
        %v738 = vrot.slane %v737, 4
        %v739 = vadd.f32 %v737, %v738
        %v740 = vrot.slane %v739, 2
        %v741 = vadd.f32 %v739, %v740
        %v742 = vrot.slane %v741, 1
        %v743 = vadd.f32 %v741, %v742
        %v744 = vadd.f32 %v620, %v624
        %v745 = vadd.f32 %v744, %v628
        %v746 = vadd.f32 %v745, %v632
        %v747 = vadd.f32 %v746, %v636
        %v748 = vadd.f32 %v747, %v640
        %v749 = vadd.f32 %v748, %v644
        %v750 = vadd.f32 %v749, %v648
        %v751 = vadd.f32 %v750, %v652
        %v752 = vadd.f32 %v751, %v656
        %v753 = vadd.f32 %v752, %v660
        %v754 = vadd.f32 %v753, %v664
        %v755 = vadd.f32 %v754, %v668
        %v756 = vadd.f32 %v755, %v672
        %v757 = vadd.f32 %v756, %v676
        %v758 = vadd.f32 %v757, %v680
        %v759 = vrot.slane %v758, 4
        %v760 = vadd.f32 %v758, %v759
        %v761 = vrot.slane %v760, 2
        %v762 = vadd.f32 %v760, %v761
        %v763 = vrot.slane %v762, 1
        %v764 = vadd.f32 %v762, %v763
        %p765 = scmp.eq.s32.totalorder %s20, 0
        // Predicated region
        $region74: #{feature_map.1} parent=68 // pred_check
          %p766 = pneg %p765
        $region75: #{feature_map.1} parent=68 // pred_check_branch
          %768 = sbr.rel (%p766) target = $region77
        $region76: #{feature_map.1} parent=68 // pred_region
          %769 = vst [vmem:[#allocation2] sm:$0xff] %v502
          %770 = vst [vmem:[#allocation2 + $0x8] sm:$0xff] %v504
          %771 = vst [vmem:[#allocation2 + $0x10] sm:$0xff] %v545
          %772 = vst [vmem:[#allocation2 + $0x18] sm:$0xff] %v547
          %773 = vst [vmem:[#allocation2 + $0x20] sm:$0xff] %v506
          %774 = vst [vmem:[#allocation2 + $0x28] sm:$0xff] %v508
          %775 = vst [vmem:[#allocation2 + $0x30] sm:$0xff] %v549
          %776 = vst [vmem:[#allocation2 + $0x38] sm:$0xff] %v551
          %v781 = vcombine.low %v701, %v722
          %v782 = vcombine.low %v743, %v764
          %v784 = vunpack.c.l.s4 1966171168
          %v785 = vunpack.c.0.s8 %v784
          %v786 = vlaneseq
          %v787 = vshrl.u32 %v786, 7
          %v788 = vsub.s32 %v785, %v787
          %v789 = vrot.slane %v781, %v788
          %v791 = vunpack.c.l.s4 1966171168
          %v792 = vunpack.c.0.s8 %v791
          %v793 = vlaneseq
          %v794 = vshrl.u32 %v793, 7
          %v795 = vsub.s32 %v792, %v794
          %v796 = vrot.slane %v782, %v795
          %v797 = vcombine.low %v789, %v796
          %v799 = vunpack.c.l.s4 1966171168
          %v800 = vunpack.c.0.s8 %v799
          %v801 = vlaneseq
          %v802 = vshrl.u32 %v801, 7
          %v803 = vsub.s32 %v800, %v802
          %v804 = vrot.slane %v797, %v803
          %v806 = vlaneseq
          %vm807 = vcmp.ge.s32.totalorder %v806, 0
          %vm808 = vcmp.lt.s32.totalorder %v806, 512
          %vm809 = vmand %vm807, %vm808
          %810 = vst.msk [vmem:[#allocation3] sm:$0xf] %vm809, %v804
        $region77: #{feature_map.1} parent=68 // pred_fallthru
          _
        %p811 = scmp.ne.s32.totalorder %s20, 0
        // Predicated region
        $region78: #{feature_map.1} parent=68 // pred_check
          %p812 = pneg %p811
        $region79: #{feature_map.1} parent=68 // pred_check_branch
          %814 = sbr.rel (%p812) target = $region81
        $region80: #{feature_map.1} parent=68 // pred_region
          %v815 = vld [vmem:[#allocation2] sm:$0xff]
          %v816 = vld [vmem:[#allocation2 + $0x8] sm:$0xff]
          %v817 = vld [vmem:[#allocation2 + $0x10] sm:$0xff]
          %v818 = vld [vmem:[#allocation2 + $0x18] sm:$0xff]
          %v819 = vld [vmem:[#allocation2 + $0x20] sm:$0xff]
          %v820 = vld [vmem:[#allocation2 + $0x28] sm:$0xff]
          %v821 = vld [vmem:[#allocation2 + $0x30] sm:$0xff]
          %v822 = vld [vmem:[#allocation2 + $0x38] sm:$0xff]
          %v823 = vadd.f32 %v815, %v502
          %v824 = vadd.f32 %v816, %v504
          %v825 = vadd.f32 %v817, %v545
          %v826 = vadd.f32 %v818, %v547
          %v827 = vadd.f32 %v819, %v506
          %v828 = vadd.f32 %v820, %v508
          %v829 = vadd.f32 %v821, %v549
          %v830 = vadd.f32 %v822, %v551
          %831 = vst [vmem:[#allocation2] sm:$0xff] %v823
          %832 = vst [vmem:[#allocation2 + $0x8] sm:$0xff] %v824
          %833 = vst [vmem:[#allocation2 + $0x10] sm:$0xff] %v825
          %834 = vst [vmem:[#allocation2 + $0x18] sm:$0xff] %v826
          %835 = vst [vmem:[#allocation2 + $0x20] sm:$0xff] %v827
          %836 = vst [vmem:[#allocation2 + $0x28] sm:$0xff] %v828
          %837 = vst [vmem:[#allocation2 + $0x30] sm:$0xff] %v829
          %838 = vst [vmem:[#allocation2 + $0x38] sm:$0xff] %v830
          %v839 = vld [vmem:[#allocation3] sm:$0xf]
          %v844 = vcombine.low %v701, %v722
          %v845 = vcombine.low %v743, %v764
          %v847 = vunpack.c.l.s4 1966171168
          %v848 = vunpack.c.0.s8 %v847
          %v849 = vlaneseq
          %v850 = vshrl.u32 %v849, 7
          %v851 = vsub.s32 %v848, %v850
          %v852 = vrot.slane %v844, %v851
          %v854 = vunpack.c.l.s4 1966171168
          %v855 = vunpack.c.0.s8 %v854
          %v856 = vlaneseq
          %v857 = vshrl.u32 %v856, 7
          %v858 = vsub.s32 %v855, %v857
          %v859 = vrot.slane %v845, %v858
          %v860 = vcombine.low %v852, %v859
          %v862 = vunpack.c.l.s4 1966171168
          %v863 = vunpack.c.0.s8 %v862
          %v864 = vlaneseq
          %v865 = vshrl.u32 %v864, 7
          %v866 = vsub.s32 %v863, %v865
          %v867 = vrot.slane %v860, %v866
          %v869 = vadd.f32 %v839, %v867
          %v870 = vlaneseq
          %vm871 = vcmp.ge.s32.totalorder %v870, 0
          %vm872 = vcmp.lt.s32.totalorder %v870, 512
          %vm873 = vmand %vm871, %vm872
          %874 = vst.msk [vmem:[#allocation3] sm:$0xf] %vm873, %v869
        $region81: #{feature_map.1} parent=68 // pred_fallthru
          _
        %p875 = scmp.eq.s32.totalorder %s20, 1
        // Predicated region
        $region82: #{feature_map.1} parent=68 // pred_check
          %p876 = pneg %p875
        $region83: #{feature_map.1} parent=68 // pred_check_branch
          %878 = sbr.rel (%p876) target = $region85
        $region84: #{feature_map.1} parent=68 // pred_region
          %v879 = vld [vmem:[#allocation2] sm:$0xff]
          %v880 = vld [vmem:[#allocation2 + $0x8] sm:$0xff]
          %v881 = vld [vmem:[#allocation2 + $0x10] sm:$0xff]
          %v882 = vld [vmem:[#allocation2 + $0x18] sm:$0xff]
          %v883 = vld [vmem:[#allocation2 + $0x20] sm:$0xff]
          %v884 = vld [vmem:[#allocation2 + $0x28] sm:$0xff]
          %v885 = vld [vmem:[#allocation2 + $0x30] sm:$0xff]
          %v886 = vld [vmem:[#allocation2 + $0x38] sm:$0xff]
          %v887 = vld [vmem:[#allocation3] sm:$0xf]
          %v888 = vadd.f32 %v879, 0.0
          %v889 = vadd.f32 %v880, 0.0
          %v890 = vadd.f32 %v881, 0.0
          %v895 = vrot.slane %v879, 1
          %v896 = vrot.slane %v880, 1
          %v897 = vrot.slane %v881, 1
          %v898 = vrot.slane %v882, 1
          %899 = vrot.lane.b32.xlu0 %v895, 127
          %v900 = vpop.permute.xlu0 %899
          %901 = vrot.lane.b32.xlu0 %v896, 127
          %v902 = vpop.permute.xlu0 %901
          %903 = vrot.lane.b32.xlu0 %v897, 127
          %v904 = vpop.permute.xlu0 %903
          %905 = vrot.lane.b32.xlu0 %v898, 127
          %v906 = vpop.permute.xlu0 %905
          %vm907 = vcmask 1039360
          %v908 = vsel %vm907, %v900, %v902
          %v909 = vsel %vm907, %v902, %v904
          %v910 = vsel %vm907, %v904, %v906
          %v914 = vadd.f32 %v888, %v908
          %v915 = vadd.f32 %v889, %v909
          %v916 = vadd.f32 %v890, %v910
          %v917 = vrot.slane %v879, 2
          %v918 = vrot.slane %v880, 2
          %v919 = vrot.slane %v881, 2
          %v920 = vrot.slane %v882, 2
          %921 = vrot.lane.b32.xlu0 %v917, 126
          %v922 = vpop.permute.xlu0 %921
          %923 = vrot.lane.b32.xlu0 %v918, 126
          %v924 = vpop.permute.xlu0 %923
          %925 = vrot.lane.b32.xlu0 %v919, 126
          %v926 = vpop.permute.xlu0 %925
          %927 = vrot.lane.b32.xlu0 %v920, 126
          %v928 = vpop.permute.xlu0 %927
          %vm929 = vcmask 1031168
          %v930 = vsel %vm929, %v922, %v924
          %v931 = vsel %vm929, %v924, %v926
          %v932 = vsel %vm929, %v926, %v928
          %v936 = vadd.f32 %v914, %v930
          %v937 = vadd.f32 %v915, %v931
          %v938 = vadd.f32 %v916, %v932
          %v939 = vrot.slane %v879, 3
          %v940 = vrot.slane %v880, 3
          %v941 = vrot.slane %v881, 3
          %v942 = vrot.slane %v882, 3
          %943 = vrot.lane.b32.xlu0 %v939, 110
          %v944 = vpop.permute.xlu0 %943
          %945 = vrot.lane.b32.xlu0 %v940, 110
          %v946 = vpop.permute.xlu0 %945
          %947 = vrot.lane.b32.xlu0 %v941, 110
          %v948 = vpop.permute.xlu0 %947
          %949 = vrot.lane.b32.xlu0 %v942, 110
          %v950 = vpop.permute.xlu0 %949
          %vm951 = vcmask 900096
          %v952 = vsel %vm951, %v944, %v946
          %v953 = vsel %vm951, %v946, %v948
          %v954 = vsel %vm951, %v948, %v950
          %v958 = vadd.f32 %v936, %v952
          %v959 = vadd.f32 %v937, %v953
          %v960 = vadd.f32 %v938, %v954
          %v961 = vrot.slane %v879, 4
          %v962 = vrot.slane %v880, 4
          %v963 = vrot.slane %v881, 4
          %v964 = vrot.slane %v882, 4
          %965 = vrot.lane.b32.xlu0 %v961, 109
          %v966 = vpop.permute.xlu0 %965
          %967 = vrot.lane.b32.xlu0 %v962, 109
          %v968 = vpop.permute.xlu0 %967
          %969 = vrot.lane.b32.xlu0 %v963, 109
          %v970 = vpop.permute.xlu0 %969
          %971 = vrot.lane.b32.xlu0 %v964, 109
          %v972 = vpop.permute.xlu0 %971
          %vm973 = vcmask 891904
          %v974 = vsel %vm973, %v966, %v968
          %v975 = vsel %vm973, %v968, %v970
          %v976 = vsel %vm973, %v970, %v972
          %v980 = vadd.f32 %v958, %v974
          %v981 = vadd.f32 %v959, %v975
          %v982 = vadd.f32 %v960, %v976
          %v983 = vrot.slane %v879, 5
          %v984 = vrot.slane %v880, 5
          %v985 = vrot.slane %v881, 5
          %v986 = vrot.slane %v882, 5
          %987 = vrot.lane.b32.xlu0 %v983, 108
          %v988 = vpop.permute.xlu0 %987
          %989 = vrot.lane.b32.xlu0 %v984, 108
          %v990 = vpop.permute.xlu0 %989
          %991 = vrot.lane.b32.xlu0 %v985, 108
          %v992 = vpop.permute.xlu0 %991
          %993 = vrot.lane.b32.xlu0 %v986, 108
          %v994 = vpop.permute.xlu0 %993
          %vm995 = vcmask 883712
          %v996 = vsel %vm995, %v988, %v990
          %v997 = vsel %vm995, %v990, %v992
          %v998 = vsel %vm995, %v992, %v994
          %v1002 = vadd.f32 %v980, %v996
          %v1003 = vadd.f32 %v981, %v997
          %v1004 = vadd.f32 %v982, %v998
          %v1005 = vrot.slane %v879, 6
          %v1006 = vrot.slane %v880, 6
          %v1007 = vrot.slane %v881, 6
          %v1008 = vrot.slane %v882, 6
          %1009 = vrot.lane.b32.xlu0 %v1005, 92
          %v1010 = vpop.permute.xlu0 %1009
          %1011 = vrot.lane.b32.xlu0 %v1006, 92
          %v1012 = vpop.permute.xlu0 %1011
          %1013 = vrot.lane.b32.xlu0 %v1007, 92
          %v1014 = vpop.permute.xlu0 %1013
          %1015 = vrot.lane.b32.xlu0 %v1008, 92
          %v1016 = vpop.permute.xlu0 %1015
          %vm1017 = vcmask 752640
          %v1018 = vsel %vm1017, %v1010, %v1012
          %v1019 = vsel %vm1017, %v1012, %v1014
          %v1020 = vsel %vm1017, %v1014, %v1016
          %v1024 = vadd.f32 %v1002, %v1018
          %v1025 = vadd.f32 %v1003, %v1019
          %v1026 = vadd.f32 %v1004, %v1020
          %v1027 = vrot.slane %v879, 7
          %v1028 = vrot.slane %v880, 7
          %v1029 = vrot.slane %v881, 7
          %v1030 = vrot.slane %v882, 7
          %1031 = vrot.lane.b32.xlu0 %v1027, 91
          %v1032 = vpop.permute.xlu0 %1031
          %1033 = vrot.lane.b32.xlu0 %v1028, 91
          %v1034 = vpop.permute.xlu0 %1033
          %1035 = vrot.lane.b32.xlu0 %v1029, 91
          %v1036 = vpop.permute.xlu0 %1035
          %1037 = vrot.lane.b32.xlu0 %v1030, 91
          %v1038 = vpop.permute.xlu0 %1037
          %vm1039 = vcmask 744448
          %v1040 = vsel %vm1039, %v1032, %v1034
          %v1041 = vsel %vm1039, %v1034, %v1036
          %v1042 = vsel %vm1039, %v1036, %v1038
          %v1046 = vadd.f32 %v1024, %v1040
          %v1047 = vadd.f32 %v1025, %v1041
          %v1048 = vadd.f32 %v1026, %v1042
          %1053 = vrot.lane.b32.xlu0 %v883, 90
          %v1054 = vpop.permute.xlu0 %1053
          %1055 = vrot.lane.b32.xlu0 %v884, 90
          %v1056 = vpop.permute.xlu0 %1055
          %1057 = vrot.lane.b32.xlu0 %v885, 90
          %v1058 = vpop.permute.xlu0 %1057
          %1059 = vrot.lane.b32.xlu0 %v886, 90
          %v1060 = vpop.permute.xlu0 %1059
          %vm1061 = vcmask 736256
          %v1062 = vsel %vm1061, %v1054, %v1056
          %v1063 = vsel %vm1061, %v1056, %v1058
          %v1064 = vsel %vm1061, %v1058, %v1060
          %v1068 = vadd.f32 %v1046, %v1062
          %v1069 = vadd.f32 %v1047, %v1063
          %v1070 = vadd.f32 %v1048, %v1064
          %v1071 = vadd.f32 %v887, 0.0
          %1073 = vrot.lane.b32.xlu0 %v887, 110
          %v1074 = vpop.permute.xlu0 %1073
          %v1075 = vrot.slane %v1074, 1
          %v1076 = vsel %vm951, %v1074, %v1075
          %v1078 = vadd.f32 %v1071, %v1076
          %1079 = vrot.lane.b32.xlu0 %v887, 92
          %v1080 = vpop.permute.xlu0 %1079
          %v1081 = vrot.slane %v1080, 1
          %v1082 = vsel %vm1017, %v1080, %v1081
          %v1084 = vadd.f32 %v1078, %v1082
          %v1085 = vadd.f32 %v1084, 0.0
          %1087 = vrot.lane.b32.xlu0 %v1084, 127
          %v1088 = vpop.permute.xlu0 %1087
          %v1089 = vrot.slane %v1088, 1
          %v1090 = vsel %vm907, %v1088, %v1089
          %v1092 = vadd.f32 %v1085, %v1090
          %1093 = vrot.lane.b32.xlu0 %v1084, 126
          %v1094 = vpop.permute.xlu0 %1093
          %v1095 = vrot.slane %v1094, 1
          %v1096 = vsel %vm929, %v1094, %v1095
          %v1098 = vadd.f32 %v1092, %v1096
          %s1099 = sld [smem:[#allocation4]]
          %v1100 = vrsqrt.pop %v1098
          %v1101 = vmul.f32 %v1098, %v1100
          %vm1102 = vcmp.eq.f32.partialorder %v1098, inf
          %v1103 = vsel %vm1102, %v1098, %v1101
          %vm1104 = vcmp.eq.f32.partialorder %v1098, 0.0
          %v1105 = vand.u32 %v1098, 2147483648
          %v1106 = vsel %vm1104, %v1105, %v1103
          %v1107 = vstv %s1099
          %v1108 = vmul.f32 %v1106, %v1107
          %v1109 = vadd.f32 %v1108, 1e-08
          %v1110 = vrcp.pop %v1109
          %v1112 = vlaneseq
          %v1113 = vshrl.u32 %v1112, 7
          %v1114 = vsub.s32 0, %v1113
          %v1115 = vrot.slane %v1110, %v1114
          %v1116 = vlaneseq
          %v1117 = vshrl.u32 %v1116, 7
          %v1118 = vsub.s32 1, %v1117
          %v1119 = vrot.slane %v1110, %v1118
          %v1120 = vlaneseq
          %v1121 = vshrl.u32 %v1120, 7
          %v1122 = vsub.s32 2, %v1121
          %v1123 = vrot.slane %v1110, %v1122
          %v1127 = vmul.f32 %v1068, %v1115
          %v1128 = vmul.f32 %v1069, %v1119
          %v1129 = vmul.f32 %v1070, %v1123
          %v1133 = vcombine.low %v1127, %v1128
          %v1135 = vunpack.c.l.s4 1966171168
          %v1136 = vunpack.c.0.s8 %v1135
          %v1137 = vlaneseq
          %v1138 = vshrl.u32 %v1137, 7
          %v1139 = vsub.s32 %v1136, %v1138
          %v1140 = vrot.slane %v1133, %v1139
          %v1142 = vunpack.c.l.s4 1966171168
          %v1143 = vunpack.c.0.s8 %v1142
          %v1144 = vlaneseq
          %v1145 = vshrl.u32 %v1144, 7
          %v1146 = vsub.s32 %v1143, %v1145
          %v1147 = vrot.slane %v1129, %v1146
          %v1148 = vcombine.low %v1140, %v1147
          %v1150 = vunpack.c.l.s4 1966171168
          %v1151 = vunpack.c.0.s8 %v1150
          %v1152 = vlaneseq
          %v1153 = vshrl.u32 %v1152, 7
          %v1154 = vsub.s32 %v1151, %v1153
          %v1155 = vrot.slane %v1148, %v1154
          %v1157 = vlaneseq
          %vm1158 = vcmp.ge.s32.totalorder %v1157, 0
          %vm1159 = vcmp.lt.s32.totalorder %v1157, 384
          %vm1160 = vmand %vm1158, %vm1159
          %1161 = vst.msk [vmem:[%s265] sm:$0x7] %vm1160, %v1155
        $region85: #{feature_map.1} parent=68 // pred_fallthru
          _
        %p1162 = scmp.lt.s32.totalorder %s19, 1
        %s1163 = scalar_select %p1162, %s19, 1
        %s1164 = smul.addr %s1163, 3
        %s1165 = scalar_lea.vmem %s3, %s1164
        // Predicated region
        $region86: #{feature_map.1} parent=68 // pred_check
          %p1166 = pneg %p120
        $region87: #{feature_map.1} parent=68 // pred_check_branch
          %1168 = sbr.rel (%p1166) target = $region89
        $region88: #{feature_map.1} parent=68 // pred_region
          _
        $region89: #{feature_map.1} parent=68 // pred_fallthru
          _
      $region69: #{feature_map.1} parent=5 // pred_fallthru
        _
      %p1169 = scmp.le.s32.totalorder 2, %s10
      // Predicated region
      $region90: #{feature_map.1} parent=5 // pred_check
        %p1170 = pneg %p1169
      $region91: #{feature_map.1} parent=5 // pred_check_branch
        %1172 = sbr.rel (%p1170) target = $region93
      $region92: #{feature_map.1} parent=5 // pred_region
        %s1173 = ssub.s32 %s10, 2
        // Predicated region
        $region94: #{feature_map.1} parent=92 // pred_check
          %p1174 = pneg %p126
        $region95: #{feature_map.1} parent=92 // pred_check_branch
          %1176 = sbr.rel (%p1174) target = $region97
        $region96: #{feature_map.1} parent=92 // pred_region
          %p1177 = scmp.lt.s32.totalorder %s21, 1
          %s1178 = scalar_select %p1177, %s21, 1
          %s1179 = smul.addr %s1178, 3
          %s1180 = scalar_lea.vmem %s3, %s1179
        $region97: #{feature_map.1} parent=92 // pred_fallthru
          _
      $region93: #{feature_map.1} parent=5 // pred_fallthru
        _
    $region6: #{feature_map.1} parent=1 // loop_footer
      %s14 = sadd.s32 1, %s10
    $region7: #{feature_map.1} parent=1 // loop_footer_branch
      %9 = sbr.rel target = $region3
    $region8: #{feature_map.1} parent=1 // loop_exit
      _

</llo_original>
